<compile_context>
chip_gen: v5e
topology: v5e:2x2
jax: 0.10.0
libtpu: 0.0.40
codegen_flags: <defaults>
</compile_context>

<pallas_src>
import jax
import jax.numpy as jnp
from jax import lax
from jax.experimental import pallas as pl
from jax.experimental.pallas import tpu as pltpu

LANE = 128  # TPU lane width


def _round_up(x, m):
    return ((x + m - 1) // m) * m


def conv3_kernel(x_hbm, w_ref, o_ref, xbuf, sem):
    # x_hbm: (N, H+2, W+2, Cin_p)  padded input, raw HBM ref (pl.ANY, manual DMA)
    # w_ref: (9*Cin_p, Cout_p)     im2col-flattened weights (bias folded in)
    # o_ref: (1, th, W, Cout_p)    output tile (f32, lane-dense last dim)
    # xbuf : (th+2, W+2, Cin_p)    VMEM scratch holding this tile's rows + halo
    n = pl.program_id(0)
    i = pl.program_id(1)
    th = o_ref.shape[1]
    W = o_ref.shape[2]
    cin_p = xbuf.shape[2]
    cout_p = o_ref.shape[3]

    # DMA the th+2 input rows (1-row halo each side) for this (batch, h-tile).
    cp = pltpu.make_async_copy(x_hbm.at[n, pl.ds(i * th, th + 2)], xbuf, sem)
    cp.start()
    cp.wait()

    # Build the im2col slab once: (th*W, 9*Cin_p), tap-major columns matching
    # the (3, 3, Cin_p, Cout_p) -> (9*Cin_p, Cout_p) weight flattening.
    cols = []
    for kh in range(3):
        for kw in range(3):
            cols.append(xbuf[kh:kh + th, kw:kw + W, :].reshape(th * W, cin_p))
    patches = jnp.concatenate(cols, axis=-1)  # (th*W, 9*Cin_p)

    # Single fused MXU matmul; bias rides in via the constant ones-channel.
    acc = jnp.dot(patches, w_ref[...], preferred_element_type=jnp.float32)
    o_ref[0] = acc.reshape(th, W, cout_p)


def _pick_tile_h(H, W, cin_p, cout_p, vmem_budget=12 * 1024 * 1024):
    """Largest tile_h dividing H whose per-step working set fits the budget."""
    best = 1
    for th in range(1, H + 1):
        if H % th:
            continue
        xbuf = (th + 2) * (W + 2) * cin_p * 4          # halo input scratch
        wblk = 2 * 9 * cin_p * cout_p * 4              # weight block (dbl-buf)
        oblk = 2 * th * W * cout_p * 4                 # output block (dbl-buf)
        im2col = th * W * 9 * cin_p * 4                # im2col slab
        accb = th * W * cout_p * 4                     # matmul result
        if xbuf + wblk + oblk + im2col + accb <= vmem_budget:
            best = th
    return best


def conv3_forward_nhwc(x_nhwc, weight_oihw, bias, *, tile_h=None):
    """3x3 / stride 1 / pad 1 conv on NHWC input; returns NHWC f32 output."""
    N, H, W, Cin = x_nhwc.shape
    Cout = weight_oihw.shape[0]

    cin_aug = Cin + 1                      # +1 constant ones-channel (carries bias)
    cin_p = _round_up(cin_aug, LANE)
    cout_p = _round_up(Cout, LANE)

    # Input: append ones-channel, then one jnp.pad does BOTH the channel
    # zero-pad to cin_p and the spatial zero-pad by 1.
    x_aug = jnp.concatenate(
        [x_nhwc.astype(jnp.float32), jnp.ones((N, H, W, 1), jnp.float32)], axis=-1)
    x_pad = jnp.pad(x_aug, ((0, 0), (1, 1), (1, 1), (0, cin_p - cin_aug)))

    # Weights: OIHW -> HWIO, embed into padded (3,3,cin_p,cout_p), put the bias
    # in the center-tap row of the ones-channel, flatten to (9*cin_p, cout_p).
    w_hwio = jnp.transpose(weight_oihw, (2, 3, 1, 0)).astype(jnp.float32)
    w_full = jnp.zeros((3, 3, cin_p, cout_p), jnp.float32)
    w_full = w_full.at[:, :, :Cin, :Cout].set(w_hwio)
    w_full = w_full.at[1, 1, Cin, :Cout].set(bias.astype(jnp.float32))
    w_flat = w_full.reshape(9 * cin_p, cout_p)

    th = tile_h if tile_h is not None else _pick_tile_h(H, W, cin_p, cout_p)
    assert H % th == 0, f"tile_h={th} must divide H={H}"

    out_pad = pl.pallas_call(
        conv3_kernel,
        out_shape=jax.ShapeDtypeStruct((N, H, W, cout_p), jnp.float32),
        grid=(N, H // th),
        in_specs=[
            pl.BlockSpec(memory_space=pl.ANY),                       # x_pad (HBM)
            pl.BlockSpec((9 * cin_p, cout_p), lambda n, i: (0, 0)),  # weights
        ],
        out_specs=pl.BlockSpec((1, th, W, cout_p), lambda n, i: (n, i, 0, 0)),
        scratch_shapes=[
            pltpu.VMEM((th + 2, W + 2, cin_p), jnp.float32),
            pltpu.SemaphoreType.DMA(()),
        ],
        compiler_params=pltpu.CompilerParams(
            dimension_semantics=("parallel", "parallel")),
    )(x_pad, w_flat)

    return out_pad[..., :Cout]


def conv3_forward(x_nchw, weight_oihw, bias, *, tile_h=None):
    """Equivalent of nn.Conv2d(Cin, Cout, kernel_size=3, stride=1, padding=1).

    NCHW in / NCHW out to match the PyTorch module exactly; the transposes are
    boundary glue only (use conv3_forward_nhwc inside an NHWC-native model).
    """
    x_nhwc = jnp.transpose(x_nchw, (0, 2, 3, 1))
    out_nhwc = conv3_forward_nhwc(x_nhwc, weight_oihw, bias, tile_h=tile_h)
    return jnp.transpose(out_nhwc, (0, 3, 1, 2)).astype(x_nchw.dtype)


if __name__ == "__main__":
    # Small deterministic setup: batch=2, in_channels=4, out_channels=8, 16x16.
    N, Cin, Cout, H, W = 2, 4, 8, 16, 16

    key = jax.random.PRNGKey(0)
    kx, kw, kb = jax.random.split(key, 3)

    x = jax.random.normal(kx, (N, Cin, H, W), dtype=jnp.float32)
    # nn.Conv2d parameter shapes: weight (Cout, Cin, 3, 3), bias (Cout,)
    weight = jax.random.normal(kw, (Cout, Cin, 3, 3), dtype=jnp.float32) * 0.1
    bias = jax.random.normal(kb, (Cout,), dtype=jnp.float32) * 0.1

    # Reference (same semantics as PyTorch NCHW conv with padding=1).
    ref = lax.conv_general_dilated(
        x, weight, window_strides=(1, 1), padding=((1, 1), (1, 1)),
        dimension_numbers=("NCHW", "OIHW", "NCHW"),
    ) + bias[None, :, None, None]

    # Multi-tile path: grid = (2, 2), exercises the halo DMA at i > 0.
    out_tiled = jax.block_until_ready(conv3_forward(x, weight, bias, tile_h=8))
    # Auto-picked tile (whole image per grid step at this toy size).
    out_auto = jax.block_until_ready(conv3_forward(x, weight, bias))

    assert out_tiled.shape == (N, Cout, H, W)
    assert jnp.allclose(out_tiled, ref, atol=1e-4, rtol=1e-4), "tiled mismatch"
    assert jnp.allclose(out_auto, ref, atol=1e-4, rtol=1e-4), "auto-tile mismatch"

    print("KERNEL_OK")
</pallas_src>

<mosaic_0001>
module attributes {stable_mosaic.version = 11 : i64} {
  func.func @conv3_kernel(%arg0: i32, %arg1: i32, %arg2: memref<2x18x18x128xf32, #tpu.memory_space<any>>, %arg3: memref<1152x128xf32, #tpu.memory_space<vmem>>, %arg4: memref<1x8x16x128xf32, #tpu.memory_space<vmem>>, %arg5: memref<10x18x128xf32, #tpu.memory_space<vmem>>, %arg6: memref<!tpu.dma_semaphore, #tpu.memory_space<semaphore_mem>>) attributes {dimension_semantics = [#tpu.dimension_semantics<parallel>, #tpu.dimension_semantics<parallel>], iteration_bounds = array<i64: 2, 2>, scalar_prefetch = 0 : i64, scratch_operands = 2 : i64, tpu.core_type = #tpu.core_type<tc>, window_params = [{}, {pipeline_mode = #tpu.pipeline_mode<synchronous>, transform_indices = @transform_1, window_bounds = array<i64: 1152, 128>}, {transform_indices = @transform_2, window_bounds = array<i64: 1, 8, 16, 128>}]} {
    %c8_i32 = arith.constant 8 : i32
    %0 = arith.muli %arg1, %c8_i32 : i32
    %c0_i32 = arith.constant 0 : i32
    %c0_i32_0 = arith.constant 0 : i32
    %1 = tpu.memref_slice %arg2[%arg0, %0, %c0_i32, %c0_i32_0] : memref<2x18x18x128xf32, #tpu.memory_space<any>> -> memref<1x10x18x128xf32, #tpu.memory_space<any>>
    %2 = tpu.memref_squeeze %1 : memref<1x10x18x128xf32, #tpu.memory_space<any>> -> memref<10x18x128xf32, #tpu.memory_space<any>>
    tpu.enqueue_dma source(%2 : memref<10x18x128xf32, #tpu.memory_space<any>>) target(%arg5 : memref<10x18x128xf32, #tpu.memory_space<vmem>>) target_semaphore(%arg6 : memref<!tpu.dma_semaphore, #tpu.memory_space<semaphore_mem>>)
    %c0_i32_1 = arith.constant 0 : i32
    %c0_i32_2 = arith.constant 0 : i32
    %3 = tpu.memref_slice %arg2[%arg0, %0, %c0_i32_1, %c0_i32_2] : memref<2x18x18x128xf32, #tpu.memory_space<any>> -> memref<1x10x18x128xf32, #tpu.memory_space<any>>
    %4 = tpu.memref_squeeze %3 : memref<1x10x18x128xf32, #tpu.memory_space<any>> -> memref<10x18x128xf32, #tpu.memory_space<any>>
    tpu.wait_dma2 semaphore(%arg6 : memref<!tpu.dma_semaphore, #tpu.memory_space<semaphore_mem>>) src(%4 : memref<10x18x128xf32, #tpu.memory_space<any>>) dst(%arg5 : memref<10x18x128xf32, #tpu.memory_space<vmem>>)
    %c0 = arith.constant 0 : index
    %c0_3 = arith.constant 0 : index
    %c0_4 = arith.constant 0 : index
    %5 = vector.load %arg5[%c0, %c0_3, %c0_4] : memref<10x18x128xf32, #tpu.memory_space<vmem>>, vector<8x16x128xf32>
    %6 = vector.shape_cast %5 : vector<8x16x128xf32> to vector<128x128xf32>
    %c0_5 = arith.constant 0 : index
    %c1 = arith.constant 1 : index
    %c0_6 = arith.constant 0 : index
    %7 = vector.load %arg5[%c0_5, %c1, %c0_6] : memref<10x18x128xf32, #tpu.memory_space<vmem>>, vector<8x16x128xf32>
    %8 = vector.shape_cast %7 : vector<8x16x128xf32> to vector<128x128xf32>
    %c0_7 = arith.constant 0 : index
    %c2 = arith.constant 2 : index
    %c0_8 = arith.constant 0 : index
    %9 = vector.load %arg5[%c0_7, %c2, %c0_8] : memref<10x18x128xf32, #tpu.memory_space<vmem>>, vector<8x16x128xf32>
    %10 = vector.shape_cast %9 : vector<8x16x128xf32> to vector<128x128xf32>
    %c1_9 = arith.constant 1 : index
    %c0_10 = arith.constant 0 : index
    %c0_11 = arith.constant 0 : index
    %11 = vector.load %arg5[%c1_9, %c0_10, %c0_11] : memref<10x18x128xf32, #tpu.memory_space<vmem>>, vector<8x16x128xf32>
    %12 = vector.shape_cast %11 : vector<8x16x128xf32> to vector<128x128xf32>
    %c1_12 = arith.constant 1 : index
    %c1_13 = arith.constant 1 : index
    %c0_14 = arith.constant 0 : index
    %13 = vector.load %arg5[%c1_12, %c1_13, %c0_14] : memref<10x18x128xf32, #tpu.memory_space<vmem>>, vector<8x16x128xf32>
    %14 = vector.shape_cast %13 : vector<8x16x128xf32> to vector<128x128xf32>
    %c1_15 = arith.constant 1 : index
    %c2_16 = arith.constant 2 : index
    %c0_17 = arith.constant 0 : index
    %15 = vector.load %arg5[%c1_15, %c2_16, %c0_17] : memref<10x18x128xf32, #tpu.memory_space<vmem>>, vector<8x16x128xf32>
    %16 = vector.shape_cast %15 : vector<8x16x128xf32> to vector<128x128xf32>
    %c2_18 = arith.constant 2 : index
    %c0_19 = arith.constant 0 : index
    %c0_20 = arith.constant 0 : index
    %17 = vector.load %arg5[%c2_18, %c0_19, %c0_20] : memref<10x18x128xf32, #tpu.memory_space<vmem>>, vector<8x16x128xf32>
    %18 = vector.shape_cast %17 : vector<8x16x128xf32> to vector<128x128xf32>
    %c2_21 = arith.constant 2 : index
    %c1_22 = arith.constant 1 : index
    %c0_23 = arith.constant 0 : index
    %19 = vector.load %arg5[%c2_21, %c1_22, %c0_23] : memref<10x18x128xf32, #tpu.memory_space<vmem>>, vector<8x16x128xf32>
    %20 = vector.shape_cast %19 : vector<8x16x128xf32> to vector<128x128xf32>
    %c2_24 = arith.constant 2 : index
    %c2_25 = arith.constant 2 : index
    %c0_26 = arith.constant 0 : index
    %21 = vector.load %arg5[%c2_24, %c2_25, %c0_26] : memref<10x18x128xf32, #tpu.memory_space<vmem>>, vector<8x16x128xf32>
    %22 = vector.shape_cast %21 : vector<8x16x128xf32> to vector<128x128xf32>
    %23 = tpu.concatenate %6, %8, %10, %12, %14, %16, %18, %20, %22 in 1 : vector<128x128xf32>, vector<128x128xf32>, vector<128x128xf32>, vector<128x128xf32>, vector<128x128xf32>, vector<128x128xf32>, vector<128x128xf32>, vector<128x128xf32>, vector<128x128xf32> -> vector<128x1152xf32>
    %c0_27 = arith.constant 0 : index
    %c0_28 = arith.constant 0 : index
    %24 = vector.load %arg3[%c0_27, %c0_28] : memref<1152x128xf32, #tpu.memory_space<vmem>>, vector<1152x128xf32>
    %cst = arith.constant dense<0.000000e+00> : vector<128x128xf32>
    %25 = tpu.matmul %23, %24, %cst {dimension_numbers = #tpu.dot_dimension_numbers<[1], [0], [0], [1], [0, 0, 1, 1], [], []>} : vector<128x1152xf32>, vector<1152x128xf32>, vector<128x128xf32> -> vector<128x128xf32>
    %26 = vector.shape_cast %25 : vector<128x128xf32> to vector<8x16x128xf32>
    %c0_29 = arith.constant 0 : index
    %c0_30 = arith.constant 0 : index
    %c0_31 = arith.constant 0 : index
    %c0_32 = arith.constant 0 : index
    %27 = vector.load %arg4[%c0_29, %c0_30, %c0_31, %c0_32] : memref<1x8x16x128xf32, #tpu.memory_space<vmem>>, vector<1x8x16x128xf32>
    %28 = vector.shape_cast %27 : vector<1x8x16x128xf32> to vector<8x16x128xf32>
    %29 = vector.shape_cast %26 : vector<8x16x128xf32> to vector<1x8x16x128xf32>
    tpu.vector_store %arg4[%c0_29, %c0_30, %c0_31, %c0_32], %29 {strides = array<i32>} : memref<1x8x16x128xf32, #tpu.memory_space<vmem>>, vector<1x8x16x128xf32>,
    return
  }
  func.func @transform_1(%arg0: i32, %arg1: i32) -> (i32, i32) {
    %c0_i32 = arith.constant 0 : i32
    %c0_i32_0 = arith.constant 0 : i32
    %c0_i32_1 = arith.constant 0 : i32
    return %c0_i32, %c0_i32_0 : i32, i32
  }
  func.func @transform_2(%arg0: i32, %arg1: i32) -> (i32, i32, i32, i32) {
    %c0_i32 = arith.constant 0 : i32
    %c0_i32_0 = arith.constant 0 : i32
    %c0_i32_1 = arith.constant 0 : i32
    return %arg0, %arg1, %c0_i32, %c0_i32_0 : i32, i32, i32, i32
  }
}

</mosaic_0001>

<llo_original>
// kernel: tpu_custom_call.1
$region0: #{tpu_custom_call.1}
  #allocation0 [shape = 'u32[]', space=smem, size = 0x4, offset = 0x4, fixed_abs, tag = 'smem constant byte address 0x4 - core index']
  #allocation1 [shape = 'u32[72,128]{1,0:T(1,128)}', space=vmem, size = 0x9000, scoped, tag = 'internal scratch']
  #allocation2 [shape = 'f32[10,18,128]{2,1,0:T(8,128)}', space=vmem, size = 0x1e000, scoped, tag = 'scratch operand']
  #allocation3 [shape = 's32[1]{0}', space=sflag, size = 0x4, scoped, tag = 'scratch operand']
  #allocation6 [shape = 's32[]', space=sflag, size = 0x4, offset = 0, fixed_abs, tag = 'sflag constant byte address 0x0 - dummy sync flag']
  %s0 = inlined_call_operand.vmem [shape: f32[2,18,18,128], index: 0, kind: input, shape index: {}]
  %s1 = inlined_call_operand.vmem [shape: f32[1152,128], index: 1, kind: input, shape index: {}]
  %s2 = inlined_call_operand.hbm [shape: f32[2,16,16,128], index: 2, kind: output, shape index: {}]
  %s3 = sld [smem:[#allocation0]]
  $region59: #{tpu_custom_call.1} parent=0
    _
  %s5 = ssub.s32 1, %s3
  %s6 = scalar_select 0, %s5, %s3
  $region1: #{tpu_custom_call.1} parent=0
    #allocation4 [shape = 'u8[131072]{0}', space=vmem, size = 0x20000, scoped, tag = 'output window, operand 0']
    #allocation5 [shape = 's32[2]{0}', space=sflag, size = 0x8, scoped, tag = 'scoped memory for tpu_custom_call.1']
    %7 = vsyncpa [#allocation5], 0
    %s8 = scalar_lea.sflag [#allocation5], 1
    %9 = vsyncpa %s8, 0
    loop: start=0, step=1, limit=6
    $region2: #{tpu_custom_call.1} parent=1 // loop_pre_header
      _
    $region3: #{tpu_custom_call.1} parent=1 // loop_header
      %s11 = sphi 0, %s15
      %p12 = scmp.ge.s32.totalorder %s11, 6
      %s18 = sphi 0, %s30
      %s19 = sphi 0, %s26
      %s20 = sphi 0, %s18
      %s21 = sphi 0, %s19
      %s22 = sphi 0, %s20
      %s23 = sphi 0, %s21
      %s31 = sphi 0, %s31
      %s33 = sphi 0, %s31
      %s34 = sphi 0, %s33
      %s48 = sphi 0, %s34
      %s56 = sphi 0, %s58
      %s59 = sphi 0, %s56
      %s60 = sphi 0, %s59
      %s76 = sphi 0, %s60
    $region4: #{tpu_custom_call.1} parent=1 // loop_header_branch
      %14 = sbr.rel (%p12) target = $region8
    $region5: #{tpu_custom_call.1} parent=1 // loop_body
      %s16 = ssub.s32 %s11, 1
      %s17 = ssub.s32 %s11, 2
      %s24 = sadd.s32 1, %s19
      %p25 = scmp.ge.s32.totalorder %s24, 2
      %s26 = scalar_select %p25, 0, %s24
      %s27 = sadd.s32 1, %s18
      %s28 = scalar_select %p25, %s27, %s18
      %p29 = scmp.ge.s32.totalorder %s28, 2
      %s30 = scalar_select %p29, 0, %s28
      %s32 = sadd.s32 %s31, 1
      %p35 = scmp.eq.s32.totalorder %s11, 3
      %p36 = scmp.ne.s32.totalorder %s31, %s33
      %p37 = scmp.eq.s32.totalorder %s11, 0
      %p38 = por %p36, %p37
      %p39 = scmp.ne.s32.totalorder %s31, %s33
      %p40 = scmp.eq.s32.totalorder %s16, 3
      %p41 = por %p39, %p40
      %p42 = scmp.ne.s32.totalorder %s33, %s34
      %p43 = scmp.eq.s32.totalorder %s16, 0
      %p44 = por %p42, %p43
      %p45 = scmp.ne.s32.totalorder %s33, %s34
      %p46 = scmp.eq.s32.totalorder %s17, 3
      %p47 = por %p45, %p46
      %p49 = scmp.ne.s32.totalorder %s34, %s48
      %p50 = scmp.eq.s32.totalorder %s17, 0
      %p51 = por %p49, %p50
      %s52 = ssub.s32 %s18, %s30
      %s53 = ssub.s32 %s19, %s26
      %s54 = sor.u32 %s52, %s53
      %p55 = scmp.eq.s32.totalorder %s54, 0
      %s57 = sadd.s32 %s56, 1
      %s58 = scalar_select %p55, %s56, %s57
      %p61 = pneg %p55
      %p62 = scmp.eq.s32.totalorder %s11, 3
      %p63 = por %p61, %p62
      %p64 = scmp.ne.s32.totalorder %s56, %s59
      %p65 = scmp.eq.s32.totalorder %s11, 0
      %p66 = por %p64, %p65
      %p67 = scmp.ne.s32.totalorder %s56, %s59
      %p68 = scmp.eq.s32.totalorder %s16, 3
      %p69 = por %p67, %p68
      %p70 = scmp.ne.s32.totalorder %s59, %s60
      %p71 = scmp.eq.s32.totalorder %s16, 0
      %p72 = por %p70, %p71
      %p73 = scmp.ne.s32.totalorder %s59, %s60
      %p74 = scmp.eq.s32.totalorder %s17, 3
      %p75 = por %p73, %p74
      %p77 = scmp.ne.s32.totalorder %s60, %s76
      %p78 = scmp.eq.s32.totalorder %s17, 0
      %p79 = por %p77, %p78
      %p80 = scmp.le.s32.totalorder 1, %s11
      %p81 = scmp.lt.s32.totalorder %s11, 5
      %p82 = pnand %p80, %p81
      %p83 = pneg %p82
      // Predicated region
      $region9: #{tpu_custom_call.1} parent=5 // pred_check
        _
      $region10: #{tpu_custom_call.1} parent=5 // pred_check_branch
        %85 = sbr.rel (%p82) target = $region12
      $region11: #{tpu_custom_call.1} parent=5 // pred_region
        %s86 = ssub.s32 %s11, 1
        // Predicated region
        $region13: #{tpu_custom_call.1} parent=11 // pred_check
          %p87 = pneg %p44
        $region14: #{tpu_custom_call.1} parent=11 // pred_check_branch
          %89 = sbr.rel (%p87) target = $region16
        $region15: #{tpu_custom_call.1} parent=11 // pred_region
          _
        $region16: #{tpu_custom_call.1} parent=11 // pred_fallthru
          _
      $region12: #{tpu_custom_call.1} parent=5 // pred_fallthru
        _
      %p90 = scmp.lt.s32.totalorder %s11, 4
      // Predicated region
      $region17: #{tpu_custom_call.1} parent=5 // pred_check
        %p91 = pneg %p90
      $region18: #{tpu_custom_call.1} parent=5 // pred_check_branch
        %93 = sbr.rel (%p91) target = $region20
      $region19: #{tpu_custom_call.1} parent=5 // pred_region
        _
      $region20: #{tpu_custom_call.1} parent=5 // pred_fallthru
        _
      %p94 = scmp.le.s32.totalorder 1, %s11
      %p95 = scmp.lt.s32.totalorder %s11, 5
      %p96 = pnand %p94, %p95
      %p97 = pneg %p96
      // Predicated region
      $region21: #{tpu_custom_call.1} parent=5 // pred_check
        _
      $region22: #{tpu_custom_call.1} parent=5 // pred_check_branch
        %99 = sbr.rel (%p96) target = $region24
      $region23: #{tpu_custom_call.1} parent=5 // pred_region
        %s100 = ssub.s32 %s11, 1
        %p101 = pneg %p44
        %p102 = pneg %p41
        %p103 = pneg %p72
        %p104 = pneg %p69
        %s105 = sand.u32 %s59, 1
        %s106 = scalar_lea.sflag [#allocation5], %s105
        %s107 = sand.u32 %s59, 1
        %s108 = smul.addr %s107, 128
        %s109 = scalar_lea.vmem [#allocation4], %s108
        %s110 = smul.u32 8, %s21
        %s111 = smul.u32 %s21, 8
        %s112 = smul.u32 %s111, 24
        %s113 = smul.u32 %s20, 432
        %s114 = sadd.s32 %s112, %s113
        %s115 = scalar_lea.vmem %s0, %s114
        // Predicated region
        $region25: #{tpu_custom_call.1} parent=23 // pred_check
          _
        $region26: #{tpu_custom_call.1} parent=23 // pred_check_branch
          %117 = sbr.rel (0) target = $region28
        $region27: #{tpu_custom_call.1} parent=23 // pred_region
          %s118 = scalar_lea.vmem %s115, 16
          %s119 = scalar_lea.vmem [#allocation2], 16
          loop: start=0, step=1, limit=1
          $region29: #{tpu_custom_call.1} parent=27 // loop_pre_header
            _
          $region30: #{tpu_custom_call.1} parent=27 // loop_header
            %s121 = sphi 0, %s125
            %p122 = scmp.ge.s32.totalorder %s121, 1
            %s126 = sphi %s115, %s115
            %s127 = sphi [#allocation2], [#allocation2]
          $region31: #{tpu_custom_call.1} parent=27 // loop_header_branch
            %124 = sbr.rel (%p122) target = $region35
          $region32: #{tpu_custom_call.1} parent=27 // loop_body
            %v128 = vld [vmem:[%s126] sm:$0xff]
            %129 = vst [vmem:[%s127] sm:$0xff] %v128
            %v130 = vld [vmem:[%s126 + $0x8] sm:$0xff]
            %131 = vst [vmem:[%s127 + $0x8] sm:$0xff] %v130
            %v132 = vld [vmem:[%s126 + $0x18] sm:$0xff]
            %133 = vst [vmem:[%s127 + $0x18] sm:$0xff] %v132
            %v134 = vld [vmem:[%s126 + $0x20] sm:$0xff]
            %135 = vst [vmem:[%s127 + $0x20] sm:$0xff] %v134
            %v136 = vld [vmem:[%s126 + $0x30] sm:$0xff]
            %137 = vst [vmem:[%s127 + $0x30] sm:$0xff] %v136
            %v138 = vld [vmem:[%s126 + $0x38] sm:$0xff]
            %139 = vst [vmem:[%s127 + $0x38] sm:$0xff] %v138
            %v140 = vld [vmem:[%s126 + $0x48] sm:$0xff]
            %141 = vst [vmem:[%s127 + $0x48] sm:$0xff] %v140
            %v142 = vld [vmem:[%s126 + $0x50] sm:$0xff]
            %143 = vst [vmem:[%s127 + $0x50] sm:$0xff] %v142
            %v144 = vld [vmem:[%s126 + $0x60] sm:$0xff]
            %145 = vst [vmem:[%s127 + $0x60] sm:$0xff] %v144
            %v146 = vld [vmem:[%s126 + $0x68] sm:$0xff]
            %147 = vst [vmem:[%s127 + $0x68] sm:$0xff] %v146
            %v148 = vld [vmem:[%s126 + $0x78] sm:$0xff]
            %149 = vst [vmem:[%s127 + $0x78] sm:$0xff] %v148
            %v150 = vld [vmem:[%s126 + $0x80] sm:$0xff]
            %151 = vst [vmem:[%s127 + $0x80] sm:$0xff] %v150
            %v152 = vld [vmem:[%s126 + $0x90] sm:$0xff]
            %153 = vst [vmem:[%s127 + $0x90] sm:$0xff] %v152
            %v154 = vld [vmem:[%s126 + $0x98] sm:$0xff]
            %155 = vst [vmem:[%s127 + $0x98] sm:$0xff] %v154
            %v156 = vld [vmem:[%s126 + $0xa8] sm:$0xff]
            %157 = vst [vmem:[%s127 + $0xa8] sm:$0xff] %v156
            %v158 = vld [vmem:[%s126 + $0xb0] sm:$0xff]
            %159 = vst [vmem:[%s127 + $0xb0] sm:$0xff] %v158
            %v160 = vld [vmem:[%s126 + $0xc0] sm:$0xff]
            %161 = vst [vmem:[%s127 + $0xc0] sm:$0xff] %v160
            %v162 = vld [vmem:[%s126 + $0xc8] sm:$0xff]
            %163 = vst [vmem:[%s127 + $0xc8] sm:$0xff] %v162
            %v164 = vld [vmem:[%s126 + $0xd8] sm:$0xff]
            %165 = vst [vmem:[%s127 + $0xd8] sm:$0xff] %v164
            %v166 = vld [vmem:[%s126 + $0xe0] sm:$0xff]
            %167 = vst [vmem:[%s127 + $0xe0] sm:$0xff] %v166
          $region33: #{tpu_custom_call.1} parent=27 // loop_footer
            %s125 = sadd.s32 1, %s121
          $region34: #{tpu_custom_call.1} parent=27 // loop_footer_branch
            %120 = sbr.rel target = $region30
          $region35: #{tpu_custom_call.1} parent=27 // loop_exit
            _
          %s169 = ssub.s32 4, 1
          loop: start=0, step=1, limit=1
          $region36: #{tpu_custom_call.1} parent=27 // loop_pre_header
            _
          $region37: #{tpu_custom_call.1} parent=27 // loop_header
            %s171 = sphi 0, %s175
            %p172 = scmp.ge.s32.totalorder %s171, 1
            %s176 = sphi %s118, %s118
            %s177 = sphi %s119, %s119
          $region38: #{tpu_custom_call.1} parent=27 // loop_header_branch
            %174 = sbr.rel (%p172) target = $region42
          $region39: #{tpu_custom_call.1} parent=27 // loop_body
            %v178 = vld [vmem:[%s176] sm:%s169]
            %179 = vst [vmem:[%s177] sm:%s169] %v178
            %v180 = vld [vmem:[%s176 + $0x18] sm:%s169]
            %181 = vst [vmem:[%s177 + $0x18] sm:%s169] %v180
            %v182 = vld [vmem:[%s176 + $0x30] sm:%s169]
            %183 = vst [vmem:[%s177 + $0x30] sm:%s169] %v182
            %v184 = vld [vmem:[%s176 + $0x48] sm:%s169]
            %185 = vst [vmem:[%s177 + $0x48] sm:%s169] %v184
            %v186 = vld [vmem:[%s176 + $0x60] sm:%s169]
            %187 = vst [vmem:[%s177 + $0x60] sm:%s169] %v186
            %v188 = vld [vmem:[%s176 + $0x78] sm:%s169]
            %189 = vst [vmem:[%s177 + $0x78] sm:%s169] %v188
            %v190 = vld [vmem:[%s176 + $0x90] sm:%s169]
            %191 = vst [vmem:[%s177 + $0x90] sm:%s169] %v190
            %v192 = vld [vmem:[%s176 + $0xa8] sm:%s169]
            %193 = vst [vmem:[%s177 + $0xa8] sm:%s169] %v192
            %v194 = vld [vmem:[%s176 + $0xc0] sm:%s169]
            %195 = vst [vmem:[%s177 + $0xc0] sm:%s169] %v194
            %v196 = vld [vmem:[%s176 + $0xd8] sm:%s169]
            %197 = vst [vmem:[%s177 + $0xd8] sm:%s169] %v196
          $region40: #{tpu_custom_call.1} parent=27 // loop_footer
            %s175 = sadd.s32 1, %s171
          $region41: #{tpu_custom_call.1} parent=27 // loop_footer_branch
            %170 = sbr.rel target = $region37
          $region42: #{tpu_custom_call.1} parent=27 // loop_exit
            _
        $region28: #{tpu_custom_call.1} parent=23 // pred_fallthru
          _
        // Predicated region
        $region43: #{tpu_custom_call.1} parent=23 // pred_check
          _
        $region44: #{tpu_custom_call.1} parent=23 // pred_check_branch
          %200 = sbr.rel (0) target = $region46
        $region45: #{tpu_custom_call.1} parent=23 // pred_region
          %201 = vsyncadd [#allocation3], 2880
        $region46: #{tpu_custom_call.1} parent=23 // pred_fallthru
          _
        %s202 = smul.u32 10, 18
        %s203 = smul.u32 %s202, 1
        %s204 = sshll.u32 %s203, 4
        %205 = dma.done [#allocation3], %s204
        %v206 = vld [vmem:[#allocation2] sm:$0xff]
        %v207 = vld [vmem:[#allocation2 + $0x8] sm:$0xff]
        %v208 = vld [vmem:[#allocation2 + $0x18] sm:$0xff]
        %v209 = vld [vmem:[#allocation2 + $0x20] sm:$0xff]
        %v210 = vld [vmem:[#allocation2 + $0x30] sm:$0xff]
        %v211 = vld [vmem:[#allocation2 + $0x38] sm:$0xff]
        %v212 = vld [vmem:[#allocation2 + $0x48] sm:$0xff]
        %v213 = vld [vmem:[#allocation2 + $0x50] sm:$0xff]
        %v214 = vld [vmem:[#allocation2 + $0x60] sm:$0xff]
        %v215 = vld [vmem:[#allocation2 + $0x68] sm:$0xff]
        %v216 = vld [vmem:[#allocation2 + $0x78] sm:$0xff]
        %v217 = vld [vmem:[#allocation2 + $0x80] sm:$0xff]
        %v218 = vld [vmem:[#allocation2 + $0x90] sm:$0xff]
        %v219 = vld [vmem:[#allocation2 + $0x98] sm:$0xff]
        %v220 = vld [vmem:[#allocation2 + $0xa8] sm:$0xff]
        %v221 = vld [vmem:[#allocation2 + $0xb0] sm:$0xff]
        %v222 = vld [vmem:[#allocation2 + $0x1] sm:$0xff]
        %v223 = vld [vmem:[#allocation2 + $0x9] sm:$0xff]
        %v224 = vld [vmem:[#allocation2 + $0x19] sm:$0xff]
        %v225 = vld [vmem:[#allocation2 + $0x21] sm:$0xff]
        %v226 = vld [vmem:[#allocation2 + $0x31] sm:$0xff]
        %v227 = vld [vmem:[#allocation2 + $0x39] sm:$0xff]
        %v228 = vld [vmem:[#allocation2 + $0x49] sm:$0xff]
        %v229 = vld [vmem:[#allocation2 + $0x51] sm:$0xff]
        %v230 = vld [vmem:[#allocation2 + $0x61] sm:$0xff]
        %v231 = vld [vmem:[#allocation2 + $0x69] sm:$0xff]
        %v232 = vld [vmem:[#allocation2 + $0x79] sm:$0xff]
        %v233 = vld [vmem:[#allocation2 + $0x81] sm:$0xff]
        %v234 = vld [vmem:[#allocation2 + $0x91] sm:$0xff]
        %v235 = vld [vmem:[#allocation2 + $0x99] sm:$0xff]
        %v236 = vld [vmem:[#allocation2 + $0xa9] sm:$0xff]
        %v237 = vld [vmem:[#allocation2 + $0xb1] sm:$0xff]
        %v238 = vld [vmem:[#allocation2 + $0x2] sm:$0xff]
        %v239 = vld [vmem:[#allocation2 + $0xa] sm:$0xff]
        %v240 = vld [vmem:[#allocation2 + $0x1a] sm:$0xff]
        %v241 = vld [vmem:[#allocation2 + $0x22] sm:$0xff]
        %v242 = vld [vmem:[#allocation2 + $0x32] sm:$0xff]
        %v243 = vld [vmem:[#allocation2 + $0x3a] sm:$0xff]
        %v244 = vld [vmem:[#allocation2 + $0x4a] sm:$0xff]
        %v245 = vld [vmem:[#allocation2 + $0x52] sm:$0xff]
        %v246 = vld [vmem:[#allocation2 + $0x62] sm:$0xff]
        %v247 = vld [vmem:[#allocation2 + $0x6a] sm:$0xff]
        %v248 = vld [vmem:[#allocation2 + $0x7a] sm:$0xff]
        %v249 = vld [vmem:[#allocation2 + $0x82] sm:$0xff]
        %v250 = vld [vmem:[#allocation2 + $0x92] sm:$0xff]
        %v251 = vld [vmem:[#allocation2 + $0x9a] sm:$0xff]
        %v252 = vld [vmem:[#allocation2 + $0xaa] sm:$0xff]
        %v253 = vld [vmem:[#allocation2 + $0xb2] sm:$0xff]
        %s254 = scalar_lea.vmem [#allocation2], 24
        %v255 = vld [vmem:[%s254] sm:$0xff]
        %v256 = vld [vmem:[%s254 + $0x8] sm:$0xff]
        %v257 = vld [vmem:[%s254 + $0x18] sm:$0xff]
        %v258 = vld [vmem:[%s254 + $0x20] sm:$0xff]
        %v259 = vld [vmem:[%s254 + $0x30] sm:$0xff]
        %v260 = vld [vmem:[%s254 + $0x38] sm:$0xff]
        %v261 = vld [vmem:[%s254 + $0x48] sm:$0xff]
        %v262 = vld [vmem:[%s254 + $0x50] sm:$0xff]
        %v263 = vld [vmem:[%s254 + $0x60] sm:$0xff]
        %v264 = vld [vmem:[%s254 + $0x68] sm:$0xff]
        %v265 = vld [vmem:[%s254 + $0x78] sm:$0xff]
        %v266 = vld [vmem:[%s254 + $0x80] sm:$0xff]
        %v267 = vld [vmem:[%s254 + $0x90] sm:$0xff]
        %v268 = vld [vmem:[%s254 + $0x98] sm:$0xff]
        %v269 = vld [vmem:[%s254 + $0xa8] sm:$0xff]
        %v270 = vld [vmem:[%s254 + $0xb0] sm:$0xff]
        %v271 = vld [vmem:[%s254 + $0x1] sm:$0xff]
        %v272 = vld [vmem:[%s254 + $0x9] sm:$0xff]
        %v273 = vld [vmem:[%s254 + $0x19] sm:$0xff]
        %v274 = vld [vmem:[%s254 + $0x21] sm:$0xff]
        %v275 = vld [vmem:[%s254 + $0x31] sm:$0xff]
        %v276 = vld [vmem:[%s254 + $0x39] sm:$0xff]
        %v277 = vld [vmem:[%s254 + $0x49] sm:$0xff]
        %v278 = vld [vmem:[%s254 + $0x51] sm:$0xff]
        %v279 = vld [vmem:[%s254 + $0x61] sm:$0xff]
        %v280 = vld [vmem:[%s254 + $0x69] sm:$0xff]
        %v281 = vld [vmem:[%s254 + $0x79] sm:$0xff]
        %v282 = vld [vmem:[%s254 + $0x81] sm:$0xff]
        %v283 = vld [vmem:[%s254 + $0x91] sm:$0xff]
        %v284 = vld [vmem:[%s254 + $0x99] sm:$0xff]
        %v285 = vld [vmem:[%s254 + $0xa9] sm:$0xff]
        %v286 = vld [vmem:[%s254 + $0xb1] sm:$0xff]
        %v287 = vld [vmem:[%s254 + $0x2] sm:$0xff]
        %v288 = vld [vmem:[%s254 + $0xa] sm:$0xff]
        %v289 = vld [vmem:[%s254 + $0x1a] sm:$0xff]
        %v290 = vld [vmem:[%s254 + $0x22] sm:$0xff]
        %v291 = vld [vmem:[%s254 + $0x32] sm:$0xff]
        %v292 = vld [vmem:[%s254 + $0x3a] sm:$0xff]
        %v293 = vld [vmem:[%s254 + $0x4a] sm:$0xff]
        %v294 = vld [vmem:[%s254 + $0x52] sm:$0xff]
        %v295 = vld [vmem:[%s254 + $0x62] sm:$0xff]
        %v296 = vld [vmem:[%s254 + $0x6a] sm:$0xff]
        %v297 = vld [vmem:[%s254 + $0x7a] sm:$0xff]
        %v298 = vld [vmem:[%s254 + $0x82] sm:$0xff]
        %v299 = vld [vmem:[%s254 + $0x92] sm:$0xff]
        %v300 = vld [vmem:[%s254 + $0x9a] sm:$0xff]
        %v301 = vld [vmem:[%s254 + $0xaa] sm:$0xff]
        %v302 = vld [vmem:[%s254 + $0xb2] sm:$0xff]
        %s303 = scalar_lea.vmem [#allocation2], 48
        %v304 = vld [vmem:[%s303] sm:$0xff]
        %v305 = vld [vmem:[%s303 + $0x8] sm:$0xff]
        %v306 = vld [vmem:[%s303 + $0x18] sm:$0xff]
        %v307 = vld [vmem:[%s303 + $0x20] sm:$0xff]
        %v308 = vld [vmem:[%s303 + $0x30] sm:$0xff]
        %v309 = vld [vmem:[%s303 + $0x38] sm:$0xff]
        %v310 = vld [vmem:[%s303 + $0x48] sm:$0xff]
        %v311 = vld [vmem:[%s303 + $0x50] sm:$0xff]
        %v312 = vld [vmem:[%s303 + $0x60] sm:$0xff]
        %v313 = vld [vmem:[%s303 + $0x68] sm:$0xff]
        %v314 = vld [vmem:[%s303 + $0x78] sm:$0xff]
        %v315 = vld [vmem:[%s303 + $0x80] sm:$0xff]
        %v316 = vld [vmem:[%s303 + $0x90] sm:$0xff]
        %v317 = vld [vmem:[%s303 + $0x98] sm:$0xff]
        %v318 = vld [vmem:[%s303 + $0xa8] sm:$0xff]
        %v319 = vld [vmem:[%s303 + $0xb0] sm:$0xff]
        %v320 = vld [vmem:[%s303 + $0x1] sm:$0xff]
        %v321 = vld [vmem:[%s303 + $0x9] sm:$0xff]
        %v322 = vld [vmem:[%s303 + $0x19] sm:$0xff]
        %v323 = vld [vmem:[%s303 + $0x21] sm:$0xff]
        %v324 = vld [vmem:[%s303 + $0x31] sm:$0xff]
        %v325 = vld [vmem:[%s303 + $0x39] sm:$0xff]
        %v326 = vld [vmem:[%s303 + $0x49] sm:$0xff]
        %v327 = vld [vmem:[%s303 + $0x51] sm:$0xff]
        %v328 = vld [vmem:[%s303 + $0x61] sm:$0xff]
        %v329 = vld [vmem:[%s303 + $0x69] sm:$0xff]
        %v330 = vld [vmem:[%s303 + $0x79] sm:$0xff]
        %v331 = vld [vmem:[%s303 + $0x81] sm:$0xff]
        %v332 = vld [vmem:[%s303 + $0x91] sm:$0xff]
        %v333 = vld [vmem:[%s303 + $0x99] sm:$0xff]
        %v334 = vld [vmem:[%s303 + $0xa9] sm:$0xff]
        %v335 = vld [vmem:[%s303 + $0xb1] sm:$0xff]
        %v336 = vld [vmem:[%s303 + $0x2] sm:$0xff]
        %v337 = vld [vmem:[%s303 + $0xa] sm:$0xff]
        %v338 = vld [vmem:[%s303 + $0x1a] sm:$0xff]
        %v339 = vld [vmem:[%s303 + $0x22] sm:$0xff]
        %v340 = vld [vmem:[%s303 + $0x32] sm:$0xff]
        %v341 = vld [vmem:[%s303 + $0x3a] sm:$0xff]
        %v342 = vld [vmem:[%s303 + $0x4a] sm:$0xff]
        %v343 = vld [vmem:[%s303 + $0x52] sm:$0xff]
        %v344 = vld [vmem:[%s303 + $0x62] sm:$0xff]
        %v345 = vld [vmem:[%s303 + $0x6a] sm:$0xff]
        %v346 = vld [vmem:[%s303 + $0x7a] sm:$0xff]
        %v347 = vld [vmem:[%s303 + $0x82] sm:$0xff]
        %v348 = vld [vmem:[%s303 + $0x92] sm:$0xff]
        %v349 = vld [vmem:[%s303 + $0x9a] sm:$0xff]
        %v350 = vld [vmem:[%s303 + $0xaa] sm:$0xff]
        %v351 = vld [vmem:[%s303 + $0xb2] sm:$0xff]
        %v352 = vld [vmem:[%s1] sm:$0xff]
        %v353 = vld [vmem:[%s1 + $0x8] sm:$0xff]
        %v354 = vld [vmem:[%s1 + $0x10] sm:$0xff]
        %v355 = vld [vmem:[%s1 + $0x18] sm:$0xff]
        %v356 = vld [vmem:[%s1 + $0x20] sm:$0xff]
        %v357 = vld [vmem:[%s1 + $0x28] sm:$0xff]
        %v358 = vld [vmem:[%s1 + $0x30] sm:$0xff]
        %v359 = vld [vmem:[%s1 + $0x38] sm:$0xff]
        %v360 = vld [vmem:[%s1 + $0x40] sm:$0xff]
        %v361 = vld [vmem:[%s1 + $0x48] sm:$0xff]
        %v362 = vld [vmem:[%s1 + $0x50] sm:$0xff]
        %v363 = vld [vmem:[%s1 + $0x58] sm:$0xff]
        %v364 = vld [vmem:[%s1 + $0x60] sm:$0xff]
        %v365 = vld [vmem:[%s1 + $0x68] sm:$0xff]
        %v366 = vld [vmem:[%s1 + $0x70] sm:$0xff]
        %v367 = vld [vmem:[%s1 + $0x78] sm:$0xff]
        %v368 = vld [vmem:[%s1 + $0x80] sm:$0xff]
        %v369 = vld [vmem:[%s1 + $0x88] sm:$0xff]
        %v370 = vld [vmem:[%s1 + $0x90] sm:$0xff]
        %v371 = vld [vmem:[%s1 + $0x98] sm:$0xff]
        %v372 = vld [vmem:[%s1 + $0xa0] sm:$0xff]
        %v373 = vld [vmem:[%s1 + $0xa8] sm:$0xff]
        %v374 = vld [vmem:[%s1 + $0xb0] sm:$0xff]
        %v375 = vld [vmem:[%s1 + $0xb8] sm:$0xff]
        %v376 = vld [vmem:[%s1 + $0xc0] sm:$0xff]
        %v377 = vld [vmem:[%s1 + $0xc8] sm:$0xff]
        %v378 = vld [vmem:[%s1 + $0xd0] sm:$0xff]
        %v379 = vld [vmem:[%s1 + $0xd8] sm:$0xff]
        %v380 = vld [vmem:[%s1 + $0xe0] sm:$0xff]
        %v381 = vld [vmem:[%s1 + $0xe8] sm:$0xff]
        %v382 = vld [vmem:[%s1 + $0xf0] sm:$0xff]
        %v383 = vld [vmem:[%s1 + $0xf8] sm:$0xff]
        %v384 = vld [vmem:[%s1 + $0x100] sm:$0xff]
        %v385 = vld [vmem:[%s1 + $0x108] sm:$0xff]
        %v386 = vld [vmem:[%s1 + $0x110] sm:$0xff]
        %v387 = vld [vmem:[%s1 + $0x118] sm:$0xff]
        %v388 = vld [vmem:[%s1 + $0x120] sm:$0xff]
        %v389 = vld [vmem:[%s1 + $0x128] sm:$0xff]
        %v390 = vld [vmem:[%s1 + $0x130] sm:$0xff]
        %v391 = vld [vmem:[%s1 + $0x138] sm:$0xff]
        %v392 = vld [vmem:[%s1 + $0x140] sm:$0xff]
        %v393 = vld [vmem:[%s1 + $0x148] sm:$0xff]
        %v394 = vld [vmem:[%s1 + $0x150] sm:$0xff]
        %v395 = vld [vmem:[%s1 + $0x158] sm:$0xff]
        %v396 = vld [vmem:[%s1 + $0x160] sm:$0xff]
        %v397 = vld [vmem:[%s1 + $0x168] sm:$0xff]
        %v398 = vld [vmem:[%s1 + $0x170] sm:$0xff]
        %v399 = vld [vmem:[%s1 + $0x178] sm:$0xff]
        %v400 = vld [vmem:[%s1 + $0x180] sm:$0xff]
        %v401 = vld [vmem:[%s1 + $0x188] sm:$0xff]
        %v402 = vld [vmem:[%s1 + $0x190] sm:$0xff]
        %v403 = vld [vmem:[%s1 + $0x198] sm:$0xff]
        %v404 = vld [vmem:[%s1 + $0x1a0] sm:$0xff]
        %v405 = vld [vmem:[%s1 + $0x1a8] sm:$0xff]
        %v406 = vld [vmem:[%s1 + $0x1b0] sm:$0xff]
        %v407 = vld [vmem:[%s1 + $0x1b8] sm:$0xff]
        %v408 = vld [vmem:[%s1 + $0x1c0] sm:$0xff]
        %v409 = vld [vmem:[%s1 + $0x1c8] sm:$0xff]
        %v410 = vld [vmem:[%s1 + $0x1d0] sm:$0xff]
        %v411 = vld [vmem:[%s1 + $0x1d8] sm:$0xff]
        %v412 = vld [vmem:[%s1 + $0x1e0] sm:$0xff]
        %v413 = vld [vmem:[%s1 + $0x1e8] sm:$0xff]
        %v414 = vld [vmem:[%s1 + $0x1f0] sm:$0xff]
        %v415 = vld [vmem:[%s1 + $0x1f8] sm:$0xff]
        %v416 = vld [vmem:[%s1 + $0x200] sm:$0xff]
        %v417 = vld [vmem:[%s1 + $0x208] sm:$0xff]
        %v418 = vld [vmem:[%s1 + $0x210] sm:$0xff]
        %v419 = vld [vmem:[%s1 + $0x218] sm:$0xff]
        %v420 = vld [vmem:[%s1 + $0x220] sm:$0xff]
        %v421 = vld [vmem:[%s1 + $0x228] sm:$0xff]
        %v422 = vld [vmem:[%s1 + $0x230] sm:$0xff]
        %v423 = vld [vmem:[%s1 + $0x238] sm:$0xff]
        %v424 = vld [vmem:[%s1 + $0x240] sm:$0xff]
        %v425 = vld [vmem:[%s1 + $0x248] sm:$0xff]
        %v426 = vld [vmem:[%s1 + $0x250] sm:$0xff]
        %v427 = vld [vmem:[%s1 + $0x258] sm:$0xff]
        %v428 = vld [vmem:[%s1 + $0x260] sm:$0xff]
        %v429 = vld [vmem:[%s1 + $0x268] sm:$0xff]
        %v430 = vld [vmem:[%s1 + $0x270] sm:$0xff]
        %v431 = vld [vmem:[%s1 + $0x278] sm:$0xff]
        %v432 = vld [vmem:[%s1 + $0x280] sm:$0xff]
        %v433 = vld [vmem:[%s1 + $0x288] sm:$0xff]
        %v434 = vld [vmem:[%s1 + $0x290] sm:$0xff]
        %v435 = vld [vmem:[%s1 + $0x298] sm:$0xff]
        %v436 = vld [vmem:[%s1 + $0x2a0] sm:$0xff]
        %v437 = vld [vmem:[%s1 + $0x2a8] sm:$0xff]
        %v438 = vld [vmem:[%s1 + $0x2b0] sm:$0xff]
        %v439 = vld [vmem:[%s1 + $0x2b8] sm:$0xff]
        %v440 = vld [vmem:[%s1 + $0x2c0] sm:$0xff]
        %v441 = vld [vmem:[%s1 + $0x2c8] sm:$0xff]
        %v442 = vld [vmem:[%s1 + $0x2d0] sm:$0xff]
        %v443 = vld [vmem:[%s1 + $0x2d8] sm:$0xff]
        %v444 = vld [vmem:[%s1 + $0x2e0] sm:$0xff]
        %v445 = vld [vmem:[%s1 + $0x2e8] sm:$0xff]
        %v446 = vld [vmem:[%s1 + $0x2f0] sm:$0xff]
        %v447 = vld [vmem:[%s1 + $0x2f8] sm:$0xff]
        %v448 = vld [vmem:[%s1 + $0x300] sm:$0xff]
        %v449 = vld [vmem:[%s1 + $0x308] sm:$0xff]
        %v450 = vld [vmem:[%s1 + $0x310] sm:$0xff]
        %v451 = vld [vmem:[%s1 + $0x318] sm:$0xff]
        %v452 = vld [vmem:[%s1 + $0x320] sm:$0xff]
        %v453 = vld [vmem:[%s1 + $0x328] sm:$0xff]
        %v454 = vld [vmem:[%s1 + $0x330] sm:$0xff]
        %v455 = vld [vmem:[%s1 + $0x338] sm:$0xff]
        %v456 = vld [vmem:[%s1 + $0x340] sm:$0xff]
        %v457 = vld [vmem:[%s1 + $0x348] sm:$0xff]
        %v458 = vld [vmem:[%s1 + $0x350] sm:$0xff]
        %v459 = vld [vmem:[%s1 + $0x358] sm:$0xff]
        %v460 = vld [vmem:[%s1 + $0x360] sm:$0xff]
        %v461 = vld [vmem:[%s1 + $0x368] sm:$0xff]
        %v462 = vld [vmem:[%s1 + $0x370] sm:$0xff]
        %v463 = vld [vmem:[%s1 + $0x378] sm:$0xff]
        %v464 = vld [vmem:[%s1 + $0x380] sm:$0xff]
        %v465 = vld [vmem:[%s1 + $0x388] sm:$0xff]
        %v466 = vld [vmem:[%s1 + $0x390] sm:$0xff]
        %v467 = vld [vmem:[%s1 + $0x398] sm:$0xff]
        %v468 = vld [vmem:[%s1 + $0x3a0] sm:$0xff]
        %v469 = vld [vmem:[%s1 + $0x3a8] sm:$0xff]
        %v470 = vld [vmem:[%s1 + $0x3b0] sm:$0xff]
        %v471 = vld [vmem:[%s1 + $0x3b8] sm:$0xff]
        %v472 = vld [vmem:[%s1 + $0x3c0] sm:$0xff]
        %v473 = vld [vmem:[%s1 + $0x3c8] sm:$0xff]
        %v474 = vld [vmem:[%s1 + $0x3d0] sm:$0xff]
        %v475 = vld [vmem:[%s1 + $0x3d8] sm:$0xff]
        %v476 = vld [vmem:[%s1 + $0x3e0] sm:$0xff]
        %v477 = vld [vmem:[%s1 + $0x3e8] sm:$0xff]
        %v478 = vld [vmem:[%s1 + $0x3f0] sm:$0xff]
        %v479 = vld [vmem:[%s1 + $0x3f8] sm:$0xff]
        %v480 = vld [vmem:[%s1 + $0x400] sm:$0xff]
        %v481 = vld [vmem:[%s1 + $0x408] sm:$0xff]
        %v482 = vld [vmem:[%s1 + $0x410] sm:$0xff]
        %v483 = vld [vmem:[%s1 + $0x418] sm:$0xff]
        %v484 = vld [vmem:[%s1 + $0x420] sm:$0xff]
        %v485 = vld [vmem:[%s1 + $0x428] sm:$0xff]
        %v486 = vld [vmem:[%s1 + $0x430] sm:$0xff]
        %v487 = vld [vmem:[%s1 + $0x438] sm:$0xff]
        %v488 = vld [vmem:[%s1 + $0x440] sm:$0xff]
        %v489 = vld [vmem:[%s1 + $0x448] sm:$0xff]
        %v490 = vld [vmem:[%s1 + $0x450] sm:$0xff]
        %v491 = vld [vmem:[%s1 + $0x458] sm:$0xff]
        %v492 = vld [vmem:[%s1 + $0x460] sm:$0xff]
        %v493 = vld [vmem:[%s1 + $0x468] sm:$0xff]
        %v494 = vld [vmem:[%s1 + $0x470] sm:$0xff]
        %v495 = vld [vmem:[%s1 + $0x478] sm:$0xff]
        %496 = vmatpush.msra.mxu0 %v367
        %497 = vmatpush.msra.mxu0 %v366
        %498 = vmatpush.msra.mxu0 %v365
        %499 = vmatpush.msra.mxu0 %v364
        %500 = vmatpush.msra.mxu0 %v363
        %501 = vmatpush.msra.mxu0 %v362
        %502 = vmatpush.msra.mxu0 %v361
        %503 = vmatpush.msra.mxu0 %v360
        %504 = vmatpush.msra.mxu0 %v359
        %505 = vmatpush.msra.mxu0 %v358
        %506 = vmatpush.msra.mxu0 %v357
        %507 = vmatpush.msra.mxu0 %v356
        %508 = vmatpush.msra.mxu0 %v355
        %509 = vmatpush.msra.mxu0 %v354
        %510 = vmatpush.msra.mxu0 %v353
        %511 = vmatpush.msra.mxu0 %v352
        %512 = vmatmul.f32.gmra.mxu0 %v206
        %v513 = vpop.f32.mrf.mxu0
        %v514 = vadd.f32 0.0, %v513
        %515 = vmatmul.f32.gmra.mxu0 %v207
        %v516 = vpop.f32.mrf.mxu0
        %v517 = vadd.f32 0.0, %v516
        %518 = vmatmul.f32.gmra.mxu0 %v208
        %v519 = vpop.f32.mrf.mxu0
        %v520 = vadd.f32 0.0, %v519
        %521 = vmatmul.f32.gmra.mxu0 %v209
        %v522 = vpop.f32.mrf.mxu0
        %v523 = vadd.f32 0.0, %v522
        %524 = vmatmul.f32.gmra.mxu0 %v210
        %v525 = vpop.f32.mrf.mxu0
        %v526 = vadd.f32 0.0, %v525
        %527 = vmatmul.f32.gmra.mxu0 %v211
        %v528 = vpop.f32.mrf.mxu0
        %v529 = vadd.f32 0.0, %v528
        %530 = vmatmul.f32.gmra.mxu0 %v212
        %v531 = vpop.f32.mrf.mxu0
        %v532 = vadd.f32 0.0, %v531
        %533 = vmatmul.f32.gmra.mxu0 %v213
        %v534 = vpop.f32.mrf.mxu0
        %v535 = vadd.f32 0.0, %v534
        %536 = vmatmul.f32.gmra.mxu0 %v214
        %v537 = vpop.f32.mrf.mxu0
        %v538 = vadd.f32 0.0, %v537
        %539 = vmatmul.f32.gmra.mxu0 %v215
        %v540 = vpop.f32.mrf.mxu0
        %v541 = vadd.f32 0.0, %v540
        %542 = vmatmul.f32.gmra.mxu0 %v216
        %v543 = vpop.f32.mrf.mxu0
        %v544 = vadd.f32 0.0, %v543
        %545 = vmatmul.f32.gmra.mxu0 %v217
        %v546 = vpop.f32.mrf.mxu0
        %v547 = vadd.f32 0.0, %v546
        %548 = vmatmul.f32.gmra.mxu0 %v218
        %v549 = vpop.f32.mrf.mxu0
        %v550 = vadd.f32 0.0, %v549
        %551 = vmatmul.f32.gmra.mxu0 %v219
        %v552 = vpop.f32.mrf.mxu0
        %v553 = vadd.f32 0.0, %v552
        %554 = vmatmul.f32.gmra.mxu0 %v220
        %v555 = vpop.f32.mrf.mxu0
        %v556 = vadd.f32 0.0, %v555
        %557 = vmatmul.f32.gmra.mxu0 %v221
        %v558 = vpop.f32.mrf.mxu0
        %v559 = vadd.f32 0.0, %v558
        %560 = vdwg.mxu0
        %561 = vmatpush.msra.mxu0 %v383
        %562 = vmatpush.msra.mxu0 %v382
        %563 = vmatpush.msra.mxu0 %v381
        %564 = vmatpush.msra.mxu0 %v380
        %565 = vmatpush.msra.mxu0 %v379
        %566 = vmatpush.msra.mxu0 %v378
        %567 = vmatpush.msra.mxu0 %v377
        %568 = vmatpush.msra.mxu0 %v376
        %569 = vmatpush.msra.mxu0 %v375
        %570 = vmatpush.msra.mxu0 %v374
        %571 = vmatpush.msra.mxu0 %v373
        %572 = vmatpush.msra.mxu0 %v372
        %573 = vmatpush.msra.mxu0 %v371
        %574 = vmatpush.msra.mxu0 %v370
        %575 = vmatpush.msra.mxu0 %v369
        %576 = vmatpush.msra.mxu0 %v368
        %577 = vmatmul.f32.gmra.mxu0 %v222
        %v578 = vpop.f32.mrf.mxu0
        %v579 = vadd.f32 %v514, %v578
        %580 = vmatmul.f32.gmra.mxu0 %v223
        %v581 = vpop.f32.mrf.mxu0
        %v582 = vadd.f32 %v517, %v581
        %583 = vmatmul.f32.gmra.mxu0 %v224
        %v584 = vpop.f32.mrf.mxu0
        %v585 = vadd.f32 %v520, %v584
        %586 = vmatmul.f32.gmra.mxu0 %v225
        %v587 = vpop.f32.mrf.mxu0
        %v588 = vadd.f32 %v523, %v587
        %589 = vmatmul.f32.gmra.mxu0 %v226
        %v590 = vpop.f32.mrf.mxu0
        %v591 = vadd.f32 %v526, %v590
        %592 = vmatmul.f32.gmra.mxu0 %v227
        %v593 = vpop.f32.mrf.mxu0
        %v594 = vadd.f32 %v529, %v593
        %595 = vmatmul.f32.gmra.mxu0 %v228
        %v596 = vpop.f32.mrf.mxu0
        %v597 = vadd.f32 %v532, %v596
        %598 = vmatmul.f32.gmra.mxu0 %v229
        %v599 = vpop.f32.mrf.mxu0
        %v600 = vadd.f32 %v535, %v599
        %601 = vmatmul.f32.gmra.mxu0 %v230
        %v602 = vpop.f32.mrf.mxu0
        %v603 = vadd.f32 %v538, %v602
        %604 = vmatmul.f32.gmra.mxu0 %v231
        %v605 = vpop.f32.mrf.mxu0
        %v606 = vadd.f32 %v541, %v605
        %607 = vmatmul.f32.gmra.mxu0 %v232
        %v608 = vpop.f32.mrf.mxu0
        %v609 = vadd.f32 %v544, %v608
        %610 = vmatmul.f32.gmra.mxu0 %v233
        %v611 = vpop.f32.mrf.mxu0
        %v612 = vadd.f32 %v547, %v611
        %613 = vmatmul.f32.gmra.mxu0 %v234
        %v614 = vpop.f32.mrf.mxu0
        %v615 = vadd.f32 %v550, %v614
        %616 = vmatmul.f32.gmra.mxu0 %v235
        %v617 = vpop.f32.mrf.mxu0
        %v618 = vadd.f32 %v553, %v617
        %619 = vmatmul.f32.gmra.mxu0 %v236
        %v620 = vpop.f32.mrf.mxu0
        %v621 = vadd.f32 %v556, %v620
        %622 = vmatmul.f32.gmra.mxu0 %v237
        %v623 = vpop.f32.mrf.mxu0
        %v624 = vadd.f32 %v559, %v623
        %625 = vdwg.mxu0
        %626 = vmatpush.msra.mxu0 %v399
        %627 = vmatpush.msra.mxu0 %v398
        %628 = vmatpush.msra.mxu0 %v397
        %629 = vmatpush.msra.mxu0 %v396
        %630 = vmatpush.msra.mxu0 %v395
        %631 = vmatpush.msra.mxu0 %v394
        %632 = vmatpush.msra.mxu0 %v393
        %633 = vmatpush.msra.mxu0 %v392
        %634 = vmatpush.msra.mxu0 %v391
        %635 = vmatpush.msra.mxu0 %v390
        %636 = vmatpush.msra.mxu0 %v389
        %637 = vmatpush.msra.mxu0 %v388
        %638 = vmatpush.msra.mxu0 %v387
        %639 = vmatpush.msra.mxu0 %v386
        %640 = vmatpush.msra.mxu0 %v385
        %641 = vmatpush.msra.mxu0 %v384
        %642 = vmatmul.f32.gmra.mxu0 %v238
        %v643 = vpop.f32.mrf.mxu0
        %v644 = vadd.f32 %v579, %v643
        %645 = vmatmul.f32.gmra.mxu0 %v239
        %v646 = vpop.f32.mrf.mxu0
        %v647 = vadd.f32 %v582, %v646
        %648 = vmatmul.f32.gmra.mxu0 %v240
        %v649 = vpop.f32.mrf.mxu0
        %v650 = vadd.f32 %v585, %v649
        %651 = vmatmul.f32.gmra.mxu0 %v241
        %v652 = vpop.f32.mrf.mxu0
        %v653 = vadd.f32 %v588, %v652
        %654 = vmatmul.f32.gmra.mxu0 %v242
        %v655 = vpop.f32.mrf.mxu0
        %v656 = vadd.f32 %v591, %v655
        %657 = vmatmul.f32.gmra.mxu0 %v243
        %v658 = vpop.f32.mrf.mxu0
        %v659 = vadd.f32 %v594, %v658
        %660 = vmatmul.f32.gmra.mxu0 %v244
        %v661 = vpop.f32.mrf.mxu0
        %v662 = vadd.f32 %v597, %v661
        %663 = vmatmul.f32.gmra.mxu0 %v245
        %v664 = vpop.f32.mrf.mxu0
        %v665 = vadd.f32 %v600, %v664
        %666 = vmatmul.f32.gmra.mxu0 %v246
        %v667 = vpop.f32.mrf.mxu0
        %v668 = vadd.f32 %v603, %v667
        %669 = vmatmul.f32.gmra.mxu0 %v247
        %v670 = vpop.f32.mrf.mxu0
        %v671 = vadd.f32 %v606, %v670
        %672 = vmatmul.f32.gmra.mxu0 %v248
        %v673 = vpop.f32.mrf.mxu0
        %v674 = vadd.f32 %v609, %v673
        %675 = vmatmul.f32.gmra.mxu0 %v249
        %v676 = vpop.f32.mrf.mxu0
        %v677 = vadd.f32 %v612, %v676
        %678 = vmatmul.f32.gmra.mxu0 %v250
        %v679 = vpop.f32.mrf.mxu0
        %v680 = vadd.f32 %v615, %v679
        %681 = vmatmul.f32.gmra.mxu0 %v251
        %v682 = vpop.f32.mrf.mxu0
        %v683 = vadd.f32 %v618, %v682
        %684 = vmatmul.f32.gmra.mxu0 %v252
        %v685 = vpop.f32.mrf.mxu0
        %v686 = vadd.f32 %v621, %v685
        %687 = vmatmul.f32.gmra.mxu0 %v253
        %v688 = vpop.f32.mrf.mxu0
        %v689 = vadd.f32 %v624, %v688
        %690 = vdwg.mxu0
        %691 = vmatpush.msra.mxu0 %v415
        %692 = vmatpush.msra.mxu0 %v414
        %693 = vmatpush.msra.mxu0 %v413
        %694 = vmatpush.msra.mxu0 %v412
        %695 = vmatpush.msra.mxu0 %v411
        %696 = vmatpush.msra.mxu0 %v410
        %697 = vmatpush.msra.mxu0 %v409
        %698 = vmatpush.msra.mxu0 %v408
        %699 = vmatpush.msra.mxu0 %v407
        %700 = vmatpush.msra.mxu0 %v406
        %701 = vmatpush.msra.mxu0 %v405
        %702 = vmatpush.msra.mxu0 %v404
        %703 = vmatpush.msra.mxu0 %v403
        %704 = vmatpush.msra.mxu0 %v402
        %705 = vmatpush.msra.mxu0 %v401
        %706 = vmatpush.msra.mxu0 %v400
        %707 = vmatmul.f32.gmra.mxu0 %v255
        %v708 = vpop.f32.mrf.mxu0
        %v709 = vadd.f32 %v644, %v708
        %710 = vmatmul.f32.gmra.mxu0 %v256
        %v711 = vpop.f32.mrf.mxu0
        %v712 = vadd.f32 %v647, %v711
        %713 = vmatmul.f32.gmra.mxu0 %v257
        %v714 = vpop.f32.mrf.mxu0
        %v715 = vadd.f32 %v650, %v714
        %716 = vmatmul.f32.gmra.mxu0 %v258
        %v717 = vpop.f32.mrf.mxu0
        %v718 = vadd.f32 %v653, %v717
        %719 = vmatmul.f32.gmra.mxu0 %v259
        %v720 = vpop.f32.mrf.mxu0
        %v721 = vadd.f32 %v656, %v720
        %722 = vmatmul.f32.gmra.mxu0 %v260
        %v723 = vpop.f32.mrf.mxu0
        %v724 = vadd.f32 %v659, %v723
        %725 = vmatmul.f32.gmra.mxu0 %v261
        %v726 = vpop.f32.mrf.mxu0
        %v727 = vadd.f32 %v662, %v726
        %728 = vmatmul.f32.gmra.mxu0 %v262
        %v729 = vpop.f32.mrf.mxu0
        %v730 = vadd.f32 %v665, %v729
        %731 = vmatmul.f32.gmra.mxu0 %v263
        %v732 = vpop.f32.mrf.mxu0
        %v733 = vadd.f32 %v668, %v732
        %734 = vmatmul.f32.gmra.mxu0 %v264
        %v735 = vpop.f32.mrf.mxu0
        %v736 = vadd.f32 %v671, %v735
        %737 = vmatmul.f32.gmra.mxu0 %v265
        %v738 = vpop.f32.mrf.mxu0
        %v739 = vadd.f32 %v674, %v738
        %740 = vmatmul.f32.gmra.mxu0 %v266
        %v741 = vpop.f32.mrf.mxu0
        %v742 = vadd.f32 %v677, %v741
        %743 = vmatmul.f32.gmra.mxu0 %v267
        %v744 = vpop.f32.mrf.mxu0
        %v745 = vadd.f32 %v680, %v744
        %746 = vmatmul.f32.gmra.mxu0 %v268
        %v747 = vpop.f32.mrf.mxu0
        %v748 = vadd.f32 %v683, %v747
        %749 = vmatmul.f32.gmra.mxu0 %v269
        %v750 = vpop.f32.mrf.mxu0
        %v751 = vadd.f32 %v686, %v750
        %752 = vmatmul.f32.gmra.mxu0 %v270
        %v753 = vpop.f32.mrf.mxu0
        %v754 = vadd.f32 %v689, %v753
        %755 = vdwg.mxu0
        %756 = vmatpush.msra.mxu0 %v431
        %757 = vmatpush.msra.mxu0 %v430
        %758 = vmatpush.msra.mxu0 %v429
        %759 = vmatpush.msra.mxu0 %v428
        %760 = vmatpush.msra.mxu0 %v427
        %761 = vmatpush.msra.mxu0 %v426
        %762 = vmatpush.msra.mxu0 %v425
        %763 = vmatpush.msra.mxu0 %v424
        %764 = vmatpush.msra.mxu0 %v423
        %765 = vmatpush.msra.mxu0 %v422
        %766 = vmatpush.msra.mxu0 %v421
        %767 = vmatpush.msra.mxu0 %v420
        %768 = vmatpush.msra.mxu0 %v419
        %769 = vmatpush.msra.mxu0 %v418
        %770 = vmatpush.msra.mxu0 %v417
        %771 = vmatpush.msra.mxu0 %v416
        %772 = vmatmul.f32.gmra.mxu0 %v271
        %v773 = vpop.f32.mrf.mxu0
        %v774 = vadd.f32 %v709, %v773
        %775 = vmatmul.f32.gmra.mxu0 %v272
        %v776 = vpop.f32.mrf.mxu0
        %v777 = vadd.f32 %v712, %v776
        %778 = vmatmul.f32.gmra.mxu0 %v273
        %v779 = vpop.f32.mrf.mxu0
        %v780 = vadd.f32 %v715, %v779
        %781 = vmatmul.f32.gmra.mxu0 %v274
        %v782 = vpop.f32.mrf.mxu0
        %v783 = vadd.f32 %v718, %v782
        %784 = vmatmul.f32.gmra.mxu0 %v275
        %v785 = vpop.f32.mrf.mxu0
        %v786 = vadd.f32 %v721, %v785
        %787 = vmatmul.f32.gmra.mxu0 %v276
        %v788 = vpop.f32.mrf.mxu0
        %v789 = vadd.f32 %v724, %v788
        %790 = vmatmul.f32.gmra.mxu0 %v277
        %v791 = vpop.f32.mrf.mxu0
        %v792 = vadd.f32 %v727, %v791
        %793 = vmatmul.f32.gmra.mxu0 %v278
        %v794 = vpop.f32.mrf.mxu0
        %v795 = vadd.f32 %v730, %v794
        %796 = vmatmul.f32.gmra.mxu0 %v279
        %v797 = vpop.f32.mrf.mxu0
        %v798 = vadd.f32 %v733, %v797
        %799 = vmatmul.f32.gmra.mxu0 %v280
        %v800 = vpop.f32.mrf.mxu0
        %v801 = vadd.f32 %v736, %v800
        %802 = vmatmul.f32.gmra.mxu0 %v281
        %v803 = vpop.f32.mrf.mxu0
        %v804 = vadd.f32 %v739, %v803
        %805 = vmatmul.f32.gmra.mxu0 %v282
        %v806 = vpop.f32.mrf.mxu0
        %v807 = vadd.f32 %v742, %v806
        %808 = vmatmul.f32.gmra.mxu0 %v283
        %v809 = vpop.f32.mrf.mxu0
        %v810 = vadd.f32 %v745, %v809
        %811 = vmatmul.f32.gmra.mxu0 %v284
        %v812 = vpop.f32.mrf.mxu0
        %v813 = vadd.f32 %v748, %v812
        %814 = vmatmul.f32.gmra.mxu0 %v285
        %v815 = vpop.f32.mrf.mxu0
        %v816 = vadd.f32 %v751, %v815
        %817 = vmatmul.f32.gmra.mxu0 %v286
        %v818 = vpop.f32.mrf.mxu0
        %v819 = vadd.f32 %v754, %v818
        %820 = vdwg.mxu0
        %821 = vmatpush.msra.mxu0 %v447
        %822 = vmatpush.msra.mxu0 %v446
        %823 = vmatpush.msra.mxu0 %v445
        %824 = vmatpush.msra.mxu0 %v444
        %825 = vmatpush.msra.mxu0 %v443
        %826 = vmatpush.msra.mxu0 %v442
        %827 = vmatpush.msra.mxu0 %v441
        %828 = vmatpush.msra.mxu0 %v440
        %829 = vmatpush.msra.mxu0 %v439
        %830 = vmatpush.msra.mxu0 %v438
        %831 = vmatpush.msra.mxu0 %v437
        %832 = vmatpush.msra.mxu0 %v436
        %833 = vmatpush.msra.mxu0 %v435
        %834 = vmatpush.msra.mxu0 %v434
        %835 = vmatpush.msra.mxu0 %v433
        %836 = vmatpush.msra.mxu0 %v432
        %837 = vmatmul.f32.gmra.mxu0 %v287
        %v838 = vpop.f32.mrf.mxu0
        %v839 = vadd.f32 %v774, %v838
        %840 = vmatmul.f32.gmra.mxu0 %v288
        %v841 = vpop.f32.mrf.mxu0
        %v842 = vadd.f32 %v777, %v841
        %843 = vmatmul.f32.gmra.mxu0 %v289
        %v844 = vpop.f32.mrf.mxu0
        %v845 = vadd.f32 %v780, %v844
        %846 = vmatmul.f32.gmra.mxu0 %v290
        %v847 = vpop.f32.mrf.mxu0
        %v848 = vadd.f32 %v783, %v847
        %849 = vmatmul.f32.gmra.mxu0 %v291
        %v850 = vpop.f32.mrf.mxu0
        %v851 = vadd.f32 %v786, %v850
        %852 = vmatmul.f32.gmra.mxu0 %v292
        %v853 = vpop.f32.mrf.mxu0
        %v854 = vadd.f32 %v789, %v853
        %855 = vmatmul.f32.gmra.mxu0 %v293
        %v856 = vpop.f32.mrf.mxu0
        %v857 = vadd.f32 %v792, %v856
        %858 = vmatmul.f32.gmra.mxu0 %v294
        %v859 = vpop.f32.mrf.mxu0
        %v860 = vadd.f32 %v795, %v859
        %861 = vmatmul.f32.gmra.mxu0 %v295
        %v862 = vpop.f32.mrf.mxu0
        %v863 = vadd.f32 %v798, %v862
        %864 = vmatmul.f32.gmra.mxu0 %v296
        %v865 = vpop.f32.mrf.mxu0
        %v866 = vadd.f32 %v801, %v865
        %867 = vmatmul.f32.gmra.mxu0 %v297
        %v868 = vpop.f32.mrf.mxu0
        %v869 = vadd.f32 %v804, %v868
        %870 = vmatmul.f32.gmra.mxu0 %v298
        %v871 = vpop.f32.mrf.mxu0
        %v872 = vadd.f32 %v807, %v871
        %873 = vmatmul.f32.gmra.mxu0 %v299
        %v874 = vpop.f32.mrf.mxu0
        %v875 = vadd.f32 %v810, %v874
        %876 = vmatmul.f32.gmra.mxu0 %v300
        %v877 = vpop.f32.mrf.mxu0
        %v878 = vadd.f32 %v813, %v877
        %879 = vmatmul.f32.gmra.mxu0 %v301
        %v880 = vpop.f32.mrf.mxu0
        %v881 = vadd.f32 %v816, %v880
        %882 = vmatmul.f32.gmra.mxu0 %v302
        %v883 = vpop.f32.mrf.mxu0
        %v884 = vadd.f32 %v819, %v883
        %885 = vdwg.mxu0
        %886 = vmatpush.msra.mxu0 %v463
        %887 = vmatpush.msra.mxu0 %v462
        %888 = vmatpush.msra.mxu0 %v461
        %889 = vmatpush.msra.mxu0 %v460
        %890 = vmatpush.msra.mxu0 %v459
        %891 = vmatpush.msra.mxu0 %v458
        %892 = vmatpush.msra.mxu0 %v457
        %893 = vmatpush.msra.mxu0 %v456
        %894 = vmatpush.msra.mxu0 %v455
        %895 = vmatpush.msra.mxu0 %v454
        %896 = vmatpush.msra.mxu0 %v453
        %897 = vmatpush.msra.mxu0 %v452
        %898 = vmatpush.msra.mxu0 %v451
        %899 = vmatpush.msra.mxu0 %v450
        %900 = vmatpush.msra.mxu0 %v449
        %901 = vmatpush.msra.mxu0 %v448
        %902 = vmatmul.f32.gmra.mxu0 %v304
        %v903 = vpop.f32.mrf.mxu0
        %v904 = vadd.f32 %v839, %v903
        %905 = vmatmul.f32.gmra.mxu0 %v305
        %v906 = vpop.f32.mrf.mxu0
        %v907 = vadd.f32 %v842, %v906
        %908 = vmatmul.f32.gmra.mxu0 %v306
        %v909 = vpop.f32.mrf.mxu0
        %v910 = vadd.f32 %v845, %v909
        %911 = vmatmul.f32.gmra.mxu0 %v307
        %v912 = vpop.f32.mrf.mxu0
        %v913 = vadd.f32 %v848, %v912
        %914 = vmatmul.f32.gmra.mxu0 %v308
        %v915 = vpop.f32.mrf.mxu0
        %v916 = vadd.f32 %v851, %v915
        %917 = vmatmul.f32.gmra.mxu0 %v309
        %v918 = vpop.f32.mrf.mxu0
        %v919 = vadd.f32 %v854, %v918
        %920 = vmatmul.f32.gmra.mxu0 %v310
        %v921 = vpop.f32.mrf.mxu0
        %v922 = vadd.f32 %v857, %v921
        %923 = vmatmul.f32.gmra.mxu0 %v311
        %v924 = vpop.f32.mrf.mxu0
        %v925 = vadd.f32 %v860, %v924
        %926 = vmatmul.f32.gmra.mxu0 %v312
        %v927 = vpop.f32.mrf.mxu0
        %v928 = vadd.f32 %v863, %v927
        %929 = vmatmul.f32.gmra.mxu0 %v313
        %v930 = vpop.f32.mrf.mxu0
        %v931 = vadd.f32 %v866, %v930
        %932 = vmatmul.f32.gmra.mxu0 %v314
        %v933 = vpop.f32.mrf.mxu0
        %v934 = vadd.f32 %v869, %v933
        %935 = vmatmul.f32.gmra.mxu0 %v315
        %v936 = vpop.f32.mrf.mxu0
        %v937 = vadd.f32 %v872, %v936
        %938 = vmatmul.f32.gmra.mxu0 %v316
        %v939 = vpop.f32.mrf.mxu0
        %v940 = vadd.f32 %v875, %v939
        %941 = vmatmul.f32.gmra.mxu0 %v317
        %v942 = vpop.f32.mrf.mxu0
        %v943 = vadd.f32 %v878, %v942
        %944 = vmatmul.f32.gmra.mxu0 %v318
        %v945 = vpop.f32.mrf.mxu0
        %v946 = vadd.f32 %v881, %v945
        %947 = vmatmul.f32.gmra.mxu0 %v319
        %v948 = vpop.f32.mrf.mxu0
        %v949 = vadd.f32 %v884, %v948
        %950 = vdwg.mxu0
        %951 = vmatpush.msra.mxu0 %v479
        %952 = vmatpush.msra.mxu0 %v478
        %953 = vmatpush.msra.mxu0 %v477
        %954 = vmatpush.msra.mxu0 %v476
        %955 = vmatpush.msra.mxu0 %v475
        %956 = vmatpush.msra.mxu0 %v474
        %957 = vmatpush.msra.mxu0 %v473
        %958 = vmatpush.msra.mxu0 %v472
        %959 = vmatpush.msra.mxu0 %v471
        %960 = vmatpush.msra.mxu0 %v470
        %961 = vmatpush.msra.mxu0 %v469
        %962 = vmatpush.msra.mxu0 %v468
        %963 = vmatpush.msra.mxu0 %v467
        %964 = vmatpush.msra.mxu0 %v466
        %965 = vmatpush.msra.mxu0 %v465
        %966 = vmatpush.msra.mxu0 %v464
        %967 = vmatmul.f32.gmra.mxu0 %v320
        %v968 = vpop.f32.mrf.mxu0
        %v969 = vadd.f32 %v904, %v968
        %970 = vmatmul.f32.gmra.mxu0 %v321
        %v971 = vpop.f32.mrf.mxu0
        %v972 = vadd.f32 %v907, %v971
        %973 = vmatmul.f32.gmra.mxu0 %v322
        %v974 = vpop.f32.mrf.mxu0
        %v975 = vadd.f32 %v910, %v974
        %976 = vmatmul.f32.gmra.mxu0 %v323
        %v977 = vpop.f32.mrf.mxu0
        %v978 = vadd.f32 %v913, %v977
        %979 = vmatmul.f32.gmra.mxu0 %v324
        %v980 = vpop.f32.mrf.mxu0
        %v981 = vadd.f32 %v916, %v980
        %982 = vmatmul.f32.gmra.mxu0 %v325
        %v983 = vpop.f32.mrf.mxu0
        %v984 = vadd.f32 %v919, %v983
        %985 = vmatmul.f32.gmra.mxu0 %v326
        %v986 = vpop.f32.mrf.mxu0
        %v987 = vadd.f32 %v922, %v986
        %988 = vmatmul.f32.gmra.mxu0 %v327
        %v989 = vpop.f32.mrf.mxu0
        %v990 = vadd.f32 %v925, %v989
        %991 = vmatmul.f32.gmra.mxu0 %v328
        %v992 = vpop.f32.mrf.mxu0
        %v993 = vadd.f32 %v928, %v992
        %994 = vmatmul.f32.gmra.mxu0 %v329
        %v995 = vpop.f32.mrf.mxu0
        %v996 = vadd.f32 %v931, %v995
        %997 = vmatmul.f32.gmra.mxu0 %v330
        %v998 = vpop.f32.mrf.mxu0
        %v999 = vadd.f32 %v934, %v998
        %1000 = vmatmul.f32.gmra.mxu0 %v331
        %v1001 = vpop.f32.mrf.mxu0
        %v1002 = vadd.f32 %v937, %v1001
        %1003 = vmatmul.f32.gmra.mxu0 %v332
        %v1004 = vpop.f32.mrf.mxu0
        %v1005 = vadd.f32 %v940, %v1004
        %1006 = vmatmul.f32.gmra.mxu0 %v333
        %v1007 = vpop.f32.mrf.mxu0
        %v1008 = vadd.f32 %v943, %v1007
        %1009 = vmatmul.f32.gmra.mxu0 %v334
        %v1010 = vpop.f32.mrf.mxu0
        %v1011 = vadd.f32 %v946, %v1010
        %1012 = vmatmul.f32.gmra.mxu0 %v335
        %v1013 = vpop.f32.mrf.mxu0
        %v1014 = vadd.f32 %v949, %v1013
        %1015 = vdwg.mxu0
        %1016 = vmatpush.msra.mxu0 %v495
        %1017 = vmatpush.msra.mxu0 %v494
        %1018 = vmatpush.msra.mxu0 %v493
        %1019 = vmatpush.msra.mxu0 %v492
        %1020 = vmatpush.msra.mxu0 %v491
        %1021 = vmatpush.msra.mxu0 %v490
        %1022 = vmatpush.msra.mxu0 %v489
        %1023 = vmatpush.msra.mxu0 %v488
        %1024 = vmatpush.msra.mxu0 %v487
        %1025 = vmatpush.msra.mxu0 %v486
        %1026 = vmatpush.msra.mxu0 %v485
        %1027 = vmatpush.msra.mxu0 %v484
        %1028 = vmatpush.msra.mxu0 %v483
        %1029 = vmatpush.msra.mxu0 %v482
        %1030 = vmatpush.msra.mxu0 %v481
        %1031 = vmatpush.msra.mxu0 %v480
        %1032 = vmatmul.f32.gmra.mxu0 %v336
        %v1033 = vpop.f32.mrf.mxu0
        %v1034 = vadd.f32 %v969, %v1033
        %1035 = vmatmul.f32.gmra.mxu0 %v337
        %v1036 = vpop.f32.mrf.mxu0
        %v1037 = vadd.f32 %v972, %v1036
        %1038 = vmatmul.f32.gmra.mxu0 %v338
        %v1039 = vpop.f32.mrf.mxu0
        %v1040 = vadd.f32 %v975, %v1039
        %1041 = vmatmul.f32.gmra.mxu0 %v339
        %v1042 = vpop.f32.mrf.mxu0
        %v1043 = vadd.f32 %v978, %v1042
        %1044 = vmatmul.f32.gmra.mxu0 %v340
        %v1045 = vpop.f32.mrf.mxu0
        %v1046 = vadd.f32 %v981, %v1045
        %1047 = vmatmul.f32.gmra.mxu0 %v341
        %v1048 = vpop.f32.mrf.mxu0
        %v1049 = vadd.f32 %v984, %v1048
        %1050 = vmatmul.f32.gmra.mxu0 %v342
        %v1051 = vpop.f32.mrf.mxu0
        %v1052 = vadd.f32 %v987, %v1051
        %1053 = vmatmul.f32.gmra.mxu0 %v343
        %v1054 = vpop.f32.mrf.mxu0
        %v1055 = vadd.f32 %v990, %v1054
        %1056 = vmatmul.f32.gmra.mxu0 %v344
        %v1057 = vpop.f32.mrf.mxu0
        %v1058 = vadd.f32 %v993, %v1057
        %1059 = vmatmul.f32.gmra.mxu0 %v345
        %v1060 = vpop.f32.mrf.mxu0
        %v1061 = vadd.f32 %v996, %v1060
        %1062 = vmatmul.f32.gmra.mxu0 %v346
        %v1063 = vpop.f32.mrf.mxu0
        %v1064 = vadd.f32 %v999, %v1063
        %1065 = vmatmul.f32.gmra.mxu0 %v347
        %v1066 = vpop.f32.mrf.mxu0
        %v1067 = vadd.f32 %v1002, %v1066
        %1068 = vmatmul.f32.gmra.mxu0 %v348
        %v1069 = vpop.f32.mrf.mxu0
        %v1070 = vadd.f32 %v1005, %v1069
        %1071 = vmatmul.f32.gmra.mxu0 %v349
        %v1072 = vpop.f32.mrf.mxu0
        %v1073 = vadd.f32 %v1008, %v1072
        %1074 = vmatmul.f32.gmra.mxu0 %v350
        %v1075 = vpop.f32.mrf.mxu0
        %v1076 = vadd.f32 %v1011, %v1075
        %1077 = vmatmul.f32.gmra.mxu0 %v351
        %v1078 = vpop.f32.mrf.mxu0
        %v1079 = vadd.f32 %v1014, %v1078
        %1080 = vdwg.mxu0
        %1081 = vst [vmem:[%s109] sm:$0xff] %v1034
        %1082 = vst [vmem:[%s109 + $0x8] sm:$0xff] %v1037
        %1083 = vst [vmem:[%s109 + $0x10] sm:$0xff] %v1040
        %1084 = vst [vmem:[%s109 + $0x18] sm:$0xff] %v1043
        %1085 = vst [vmem:[%s109 + $0x20] sm:$0xff] %v1046
        %1086 = vst [vmem:[%s109 + $0x28] sm:$0xff] %v1049
        %1087 = vst [vmem:[%s109 + $0x30] sm:$0xff] %v1052
        %1088 = vst [vmem:[%s109 + $0x38] sm:$0xff] %v1055
        %1089 = vst [vmem:[%s109 + $0x40] sm:$0xff] %v1058
        %1090 = vst [vmem:[%s109 + $0x48] sm:$0xff] %v1061
        %1091 = vst [vmem:[%s109 + $0x50] sm:$0xff] %v1064
        %1092 = vst [vmem:[%s109 + $0x58] sm:$0xff] %v1067
        %1093 = vst [vmem:[%s109 + $0x60] sm:$0xff] %v1070
        %1094 = vst [vmem:[%s109 + $0x68] sm:$0xff] %v1073
        %1095 = vst [vmem:[%s109 + $0x70] sm:$0xff] %v1076
        %1096 = vst [vmem:[%s109 + $0x78] sm:$0xff] %v1079
        %s1097 = sand.u32 %s59, 1
        %s1098 = scalar_lea.sflag [#allocation5], %s1097
        %s1099 = sand.u32 %s59, 1
        %s1100 = smul.addr %s1099, 128
        %s1101 = scalar_lea.vmem [#allocation4], %s1100
        // Predicated region
        $region47: #{tpu_custom_call.1} parent=23 // pred_check
          %p1102 = pneg %p69
        $region48: #{tpu_custom_call.1} parent=23 // pred_check_branch
          %1104 = sbr.rel (%p1102) target = $region50
        $region49: #{tpu_custom_call.1} parent=23 // pred_region
          %s1105 = smul.u32 8, %s21
          %1107 = vsyncadd %s1098, 0
          %s1108 = smul.addr %s1105, 2
          %s1109 = smul.addr %s20, 32
          %s1110 = sadd.s32 %s1108, %s1109
          %s1111 = smul.addr %s1110, 8
          %s1112 = scalar_lea.hbm %s2, %s1111
          %s1113 = sshll.u32 %s1101, 4
          %s1114 = int_to_ptr.vmem [resolvable:$true] %s1113
          %s1115 = sshll.u32 %s1112, 4
          %s1116 = int_to_ptr.hbm [resolvable:$true] %s1115
          %1121 = dma.vmem_to_hbm [thread:$0]  %s1114, 2048, %s1116, %s1098, 128, 128, 8
        $region50: #{tpu_custom_call.1} parent=23 // pred_fallthru
          _
      $region24: #{tpu_custom_call.1} parent=5 // pred_fallthru
        _
      %p1122 = scmp.le.s32.totalorder 2, %s11
      // Predicated region
      $region51: #{tpu_custom_call.1} parent=5 // pred_check
        %p1123 = pneg %p1122
      $region52: #{tpu_custom_call.1} parent=5 // pred_check_branch
        %1125 = sbr.rel (%p1123) target = $region54
      $region53: #{tpu_custom_call.1} parent=5 // pred_region
        %s1126 = ssub.s32 %s11, 2
        // Predicated region
        $region55: #{tpu_custom_call.1} parent=53 // pred_check
          %p1127 = pneg %p75
        $region56: #{tpu_custom_call.1} parent=53 // pred_check_branch
          %1129 = sbr.rel (%p1127) target = $region58
        $region57: #{tpu_custom_call.1} parent=53 // pred_region
          %s1130 = sand.u32 %s60, 1
          %s1131 = scalar_lea.sflag [#allocation5], %s1130
          %s1132 = sand.u32 %s60, 1
          %s1133 = smul.addr %s1132, 128
          %s1134 = scalar_lea.vmem [#allocation4], %s1133
          %1136 = dma.done %s1131, 2048
        $region58: #{tpu_custom_call.1} parent=53 // pred_fallthru
          _
      $region54: #{tpu_custom_call.1} parent=5 // pred_fallthru
        _
    $region6: #{tpu_custom_call.1} parent=1 // loop_footer
      %s15 = sadd.s32 1, %s11
    $region7: #{tpu_custom_call.1} parent=1 // loop_footer_branch
      %10 = sbr.rel target = $region3
    $region8: #{tpu_custom_call.1} parent=1 // loop_exit
      _
    %1137 = vsyncpa [#allocation5], 1
    %s1138 = scalar_lea.sflag [#allocation5], 1
    %1139 = vsyncpa %s1138, 1
  %1140 = vsyncmov [#allocation3]
  %s1141 = vpop.sfrf %1140
  %p1142 = scmp.eq.s32.totalorder %s1141, 0
  %p1143 = pneg %p1142
  %1145 = shalt.err (%p1143)

</llo_original>
